<compile_context>
chip_gen: v7x
topology: tpu7x:2x2x1
jax: 0.10.0
libtpu: 0.0.40
codegen_flags: <defaults>
</compile_context>

<pallas_src>
import numpy as np
import jax
import jax.numpy as jnp
from jax import lax
from jax.experimental import pallas as pl
from jax.experimental.pallas import tpu as pltpu

LANE = 128


def _cdiv(a, b):
    return -(-a // b)


def _round_up(a, b):
    return _cdiv(a, b) * b


def _pick_tile_rows(B, s_raw, sub, itemsize):
    """Rows (of 128 lanes) per tile: ~1 MiB per ref per block, while keeping
    enough independent grid steps that a v7x megacore gets balanced work."""
    target_rows = max(sub, (1 << 20) // (LANE * itemsize))  # 2048 f32 / 4096 bf16
    max_tiles = _cdiv(s_raw, sub)
    n_s = min(max_tiles, max(1, _cdiv(s_raw, target_rows)))
    while B * n_s < 4 and n_s < max_tiles:      # v7x: >= 4 grid steps if possible
        n_s += 1
    if (B * n_s) % 2 == 1 and n_s < max_tiles:  # ... and an even step count
        n_s += 1
    return _round_up(_cdiv(s_raw, n_s), sub)


# ----------------------------- kernels --------------------------------------
def _berhu_elem(l1, c):
    """Elementwise berhu from an already-formed (possibly weighted) L1."""
    c2 = c * c
    inv_2c = 1.0 / (2.0 * c)   # scalar, hoisted out of the per-element chain
    # NOTE: c == 0 (adaptive + all-equal inputs) makes the unselected branch
    # 0*inf=NaN, but jnp.where still returns the (l1 <= c) branch; this
    # matches the reference semantics.
    return jnp.where(l1 <= c, l1, (l1 * l1 + c2) * inv_2c)


def _make_berhu_kernel(weighted):
    """Elementwise berhu from pred/gt(/weights); thr is a (B,) f32 SMEM array."""
    if weighted:
        def kernel(thr_ref, pred_ref, gt_ref, w_ref, out_ref):
            c = thr_ref[pl.program_id(0)]
            l1 = (jnp.abs(gt_ref[...].astype(jnp.float32)
                          - pred_ref[...].astype(jnp.float32))
                  * w_ref[...].astype(jnp.float32))
            out_ref[...] = _berhu_elem(l1, c).astype(out_ref.dtype)
    else:
        def kernel(thr_ref, pred_ref, gt_ref, out_ref):
            c = thr_ref[pl.program_id(0)]
            l1 = jnp.abs(gt_ref[...].astype(jnp.float32)
                         - pred_ref[...].astype(jnp.float32))
            out_ref[...] = _berhu_elem(l1, c).astype(out_ref.dtype)
    return kernel


def _berhu_from_l1_kernel(thr_ref, l1_ref, out_ref):
    """Second pass of the weighted adaptive path: reads only the stored L1."""
    c = thr_ref[pl.program_id(0)]
    l1 = l1_ref[...].astype(jnp.float32)
    out_ref[...] = _berhu_elem(l1, c).astype(out_ref.dtype)


def _make_l1max_kernel(weighted, ts, s_valid, need_mask):
    """Per-tile partial max of |gt - pred| (optionally * w).

    Every grid step owns its own (1, 1, 8, 128) output block, so both grid
    axes stay 'parallel'.  The reduce is sublane-group only (pure VPU vreg
    maxes); the cross-lane max happens in tiny XLA glue outside the kernel.
    The weighted variant also streams the L1 tile out for reuse in pass 2.
    """

    def _tile_max(l1, s):
        if need_mask:
            # Ragged last S tile: out-of-bounds rows hold unspecified data.
            row = lax.broadcasted_iota(jnp.int32, l1.shape, 1) + s * ts
            l1 = jnp.where(row < s_valid, l1, 0.0)  # |.| >= 0 so 0 is the identity
        # (1, ts, 128) -> (ts//8, 8, 128): split of the sublane axis, no copy.
        return jnp.max(l1.reshape(ts // 8, 8, LANE), axis=0).reshape(1, 1, 8, LANE)

    if weighted:
        def kernel(pred_ref, gt_ref, w_ref, l1_ref, mx_ref):
            s = pl.program_id(1)
            l1 = (jnp.abs(gt_ref[...].astype(jnp.float32)
                          - pred_ref[...].astype(jnp.float32))
                  * w_ref[...].astype(jnp.float32))
            l1_ref[...] = l1.astype(l1_ref.dtype)
            mx_ref[...] = _tile_max(l1, s)
    else:
        def kernel(pred_ref, gt_ref, mx_ref):
            s = pl.program_id(1)
            l1 = jnp.abs(gt_ref[...].astype(jnp.float32)
                         - pred_ref[...].astype(jnp.float32))
            mx_ref[...] = _tile_max(l1, s)
    return kernel


# ----------------------------- wrapper ---------------------------------------
def berhu(pred, gt, weights=None, mask=None, *, threshold=1.0,
          adaptive=False, image_wide=False):
    if mask is not None:
        # TODO(synk): boolean-mask indexing (L1[mask]) yields a data-dependent
        # shape; no clean Pallas equivalent, so it is not implemented.
        raise NotImplementedError("mask is not supported")

    orig_shape = gt.shape
    dtype = gt.dtype
    B = int(orig_shape[0])
    F = int(np.prod(orig_shape[1:]))

    # ---- static tiling of the per-image feature axis -----------------------
    itemsize = jnp.dtype(dtype).itemsize
    sub = max(8, 8 * (4 // itemsize))          # 8 rows f32, 16 bf16, 32 int8
    s_raw = _cdiv(F, LANE)                     # rows of 128 lanes per image
    ts = _pick_tile_rows(B, s_raw, sub, itemsize)
    if ts >= s_raw:
        # Whole image fits in one tile: pad S up to the tile so the block
        # never exceeds the array extent (pad rows are zeros -> safe for max).
        ts = _round_up(s_raw, sub)
        s_arr, n_s = ts, 1
    else:
        # Multi-tile: keep the S axis ragged (zero-copy for aligned shapes)
        # and mask the tail inside the reduction kernel.
        s_arr, n_s = s_raw, _cdiv(s_raw, ts)
    need_mask = (s_arr % ts) != 0
    F_pad = s_arr * LANE

    def _prep(x):
        x = x.reshape(B, F)
        if F_pad != F:
            # lane padding only; padded elements are zero -> |gt-pred|*w = 0.
            x = jnp.pad(x, ((0, 0), (0, F_pad - F)))
        return x.reshape(B, s_arr, LANE)

    p = _prep(pred)
    g = _prep(gt)
    ins = [p, g]
    weighted = weights is not None
    if weighted:
        # only materialize a broadcast if weights are not already full-size;
        # no dtype cast here (the kernels cast to f32 internally).
        w = weights if weights.shape == orig_shape else jnp.broadcast_to(weights, orig_shape)
        ins.append(_prep(w))

    grid = (B, n_s)
    vspec = pl.BlockSpec((1, ts, LANE), lambda i, s: (i, s, 0))
    smem_spec = pl.BlockSpec(memory_space=pltpu.MemorySpace.SMEM)
    par = pltpu.CompilerParams(dimension_semantics=("parallel", "parallel"))

    # --- adaptive threshold: per-tile partial max reduction -------------------
    l1_arr = None
    if adaptive:
        mx_shape = jax.ShapeDtypeStruct((B, n_s, 8, LANE), jnp.float32)
        mx_spec = pl.BlockSpec((1, 1, 8, LANE), lambda i, s: (i, s, 0, 0))
        max_kernel = _make_l1max_kernel(weighted, ts, s_raw, need_mask)
        if weighted:
            # pass 1 also writes the weighted L1 tile so pass 2 streams only L1.
            l1_arr, per_tile = pl.pallas_call(
                max_kernel,
                out_shape=(jax.ShapeDtypeStruct((B, s_arr, LANE), dtype), mx_shape),
                grid=grid,
                in_specs=[vspec] * 3,
                out_specs=[vspec, mx_spec],
                compiler_params=par,
            )(*ins)
        else:
            per_tile = pl.pallas_call(
                max_kernel,
                out_shape=mx_shape,
                grid=grid,
                in_specs=[vspec] * 2,
                out_specs=mx_spec,
                compiler_params=par,
            )(*ins)
        per_img_max = jnp.max(per_tile.reshape(B, -1), axis=1)  # tiny XLA glue
        if image_wide:
            thr = (0.2 * per_img_max).astype(jnp.float32)
        else:
            thr = jnp.broadcast_to(0.2 * jnp.max(per_img_max), (B,)).astype(jnp.float32)
    else:
        thr = jnp.full((B,), threshold, jnp.float32)

    # --- elementwise berhu hot path ------------------------------------------
    out_shape = jax.ShapeDtypeStruct((B, s_arr, LANE), dtype)
    if l1_arr is not None:
        out = pl.pallas_call(
            _berhu_from_l1_kernel,
            out_shape=out_shape,
            grid=grid,
            in_specs=[smem_spec, vspec],
            out_specs=vspec,
            compiler_params=par,
        )(thr, l1_arr)
    else:
        out = pl.pallas_call(
            _make_berhu_kernel(weighted),
            out_shape=out_shape,
            grid=grid,
            in_specs=[smem_spec] + [vspec] * len(ins),
            out_specs=vspec,
            compiler_params=par,
        )(thr, *ins)

    out = out.reshape(B, F_pad)
    if F_pad != F:
        out = out[:, :F]
    return out.reshape(orig_shape)


# ----------------------------- reference & test -------------------------------
def _berhu_ref(pred, gt, weights=None, threshold=1.0, adaptive=False,
               image_wide=False):
    l1 = jnp.abs(gt - pred)
    if weights is not None:
        l1 = l1 * weights
    if adaptive:
        if image_wide:
            c = 0.2 * jnp.max(l1.reshape(l1.shape[0], -1), axis=1).reshape(
                -1, *([1] * (l1.ndim - 1)))
        else:
            c = 0.2 * jnp.max(l1)
    else:
        c = threshold
    return jnp.where(l1 <= c, l1, (l1 * l1 + c * c) / (2.0 * c))


if __name__ == "__main__":
    key = jax.random.PRNGKey(0)

    cases = [
        dict(threshold=1.0, adaptive=False, image_wide=False),
        dict(threshold=0.5, adaptive=False, image_wide=False),
        dict(threshold=1.0, adaptive=True, image_wide=False),
        dict(threshold=1.0, adaptive=True, image_wide=True),
    ]
    use_weights = [False, True, False, True]

    # small shape + lane-unaligned (padded) shape + multi-tile zero-copy shape
    shapes = [(2, 4, 16, 16), (2, 3, 33, 45), (1, 2, 320, 128)]

    ok = True
    for shape in shapes:
        key, k1, k2, k3 = jax.random.split(key, 4)
        pred = jax.random.normal(k1, shape, jnp.float32)
        gt = jax.random.normal(k2, shape, jnp.float32)
        weights = jax.random.uniform(k3, shape, jnp.float32)

        for cfg, uw in zip(cases, use_weights):
            w = weights if uw else None
            out = jax.block_until_ready(berhu(pred, gt, w, **cfg))
            expect = _berhu_ref(pred, gt, w, **cfg)
            ok &= (out.shape == gt.shape)
            ok &= bool(jnp.allclose(out, expect, atol=1e-5, rtol=1e-5))

    if ok:
        print("KERNEL_OK")
    else:
        print("MISMATCH")
</pallas_src>

<mosaic_0001>
module attributes {stable_mosaic.version = 11 : i64} {
  func.func @kernel(%arg0: i32, %arg1: i32, %arg2: memref<2xf32, #tpu.memory_space<smem>>, %arg3: memref<1x8x128xf32, #tpu.memory_space<vmem>>, %arg4: memref<1x8x128xf32, #tpu.memory_space<vmem>>, %arg5: memref<1x8x128xf32, #tpu.memory_space<vmem>>) attributes {dimension_semantics = [#tpu.dimension_semantics<parallel>, #tpu.dimension_semantics<parallel>], iteration_bounds = array<i64: 2, 1>, scalar_prefetch = 0 : i64, scratch_operands = 0 : i64, tpu.core_type = #tpu.core_type<tc>, window_params = [{transform_indices = @transform_0, window_bounds = array<i64: 2>}, {transform_indices = @transform_1, window_bounds = array<i64: 1, 8, 128>}, {transform_indices = @transform_2, window_bounds = array<i64: 1, 8, 128>}, {transform_indices = @transform_3, window_bounds = array<i64: 1, 8, 128>}]} {
    %0 = arith.index_cast %arg0 : i32 to index
    %1 = memref.load %arg2[%0] : memref<2xf32, #tpu.memory_space<smem>>
    %c0 = arith.constant 0 : index
    %c0_0 = arith.constant 0 : index
    %c0_1 = arith.constant 0 : index
    %2 = vector.load %arg4[%c0, %c0_0, %c0_1] : memref<1x8x128xf32, #tpu.memory_space<vmem>>, vector<1x8x128xf32>
    %c0_2 = arith.constant 0 : index
    %c0_3 = arith.constant 0 : index
    %c0_4 = arith.constant 0 : index
    %3 = vector.load %arg3[%c0_2, %c0_3, %c0_4] : memref<1x8x128xf32, #tpu.memory_space<vmem>>, vector<1x8x128xf32>
    %4 = arith.subf %2, %3 : vector<1x8x128xf32>
    %5 = math.absf %4 : vector<1x8x128xf32>
    %6 = arith.mulf %1, %1 : f32
    %cst = arith.constant 2.000000e+00 : f32
    %7 = arith.mulf %cst, %1 : f32
    %cst_5 = arith.constant 1.000000e+00 : f32
    %8 = arith.divf %cst_5, %7 : f32
    %9 = vector.broadcast %1 : f32 to vector<1x8x128xf32>
    %10 = arith.cmpf ole, %5, %9 : vector<1x8x128xf32>
    %11 = arith.mulf %5, %5 : vector<1x8x128xf32>
    %12 = vector.broadcast %6 : f32 to vector<1x8x128xf32>
    %13 = arith.addf %11, %12 : vector<1x8x128xf32>
    %14 = vector.broadcast %8 : f32 to vector<1x8x128xf32>
    %15 = arith.mulf %13, %14 : vector<1x8x128xf32>
    %16 = arith.select %10, %5, %15 : vector<1x8x128xi1>, vector<1x8x128xf32>
    %c0_6 = arith.constant 0 : index
    %c0_7 = arith.constant 0 : index
    %c0_8 = arith.constant 0 : index
    %17 = vector.load %arg5[%c0_6, %c0_7, %c0_8] : memref<1x8x128xf32, #tpu.memory_space<vmem>>, vector<1x8x128xf32>
    tpu.vector_store %arg5[%c0_6, %c0_7, %c0_8], %16 {strides = array<i32>} : memref<1x8x128xf32, #tpu.memory_space<vmem>>, vector<1x8x128xf32>,
    return
  }
  func.func @transform_0(%arg0: i32, %arg1: i32) -> i32 {
    %c0_i32 = arith.constant 0 : i32
    %c0_i32_0 = arith.constant 0 : i32
    return %c0_i32 : i32
  }
  func.func @transform_1(%arg0: i32, %arg1: i32) -> (i32, i32, i32) {
    %c0_i32 = arith.constant 0 : i32
    %c0_i32_0 = arith.constant 0 : i32
    return %arg0, %arg1, %c0_i32 : i32, i32, i32
  }
  func.func @transform_2(%arg0: i32, %arg1: i32) -> (i32, i32, i32) {
    %c0_i32 = arith.constant 0 : i32
    %c0_i32_0 = arith.constant 0 : i32
    return %arg0, %arg1, %c0_i32 : i32, i32, i32
  }
  func.func @transform_3(%arg0: i32, %arg1: i32) -> (i32, i32, i32) {
    %c0_i32 = arith.constant 0 : i32
    %c0_i32_0 = arith.constant 0 : i32
    return %arg0, %arg1, %c0_i32 : i32, i32, i32
  }
}

</mosaic_0001>

<llo_original>
// kernel: tpu_custom_call.1
$region0: #{tpu_custom_call.1}
  #allocation0 [shape = 'u32[]', space=smem, size = 0x4, offset = 0x4, fixed_abs, tag = 'smem constant byte address 0x4 - core index']
  #allocation1 [shape = 'u32[144,128]{1,0:T(1,128)}', space=vmem, size = 0x12000, scoped, tag = 'internal scratch']
  %s0 = inlined_call_operand.hbm [shape: f32[2], index: 0, kind: input, shape index: {}]
  %s1 = inlined_call_operand.hbm [shape: f32[2,8,128], index: 1, kind: input, shape index: {}]
  %s2 = inlined_call_operand.hbm [shape: f32[2,8,128], index: 2, kind: input, shape index: {}]
  %s3 = inlined_call_operand.hbm [shape: f32[2,8,128], index: 3, kind: output, shape index: {}]
  %s4 = sld [smem:[#allocation0]]
  $region57: #{tpu_custom_call.1} parent=0
    _
  %s6 = ssub.s32 1, %s4
  %s7 = scalar_select 0, %s6, %s4
  $region1: #{tpu_custom_call.1} parent=0
    #allocation2 [shape = 'u8[512]{0}', space=smem, size = 0x200, scoped, tag = 'input window, operand 0, single buffered']
    #allocation3 [shape = 's32[2]{0}', space=sflag, size = 0x8, scoped, tag = 'scoped memory for tpu_custom_call.1']
    #allocation4 [shape = 's32[2]{0}', space=sflag, size = 0x8, scoped, tag = 'scoped memory for tpu_custom_call.1']
    #allocation5 [shape = 's32[2]{0}', space=sflag, size = 0x8, scoped, tag = 'scoped memory for tpu_custom_call.1']
    #allocation6 [shape = 'u8[8192]{0}', space=vmem, size = 0x2000, scoped, tag = 'input window, operand 1']
    #allocation7 [shape = 'u8[8192]{0}', space=vmem, size = 0x2000, scoped, tag = 'input window, operand 2']
    #allocation8 [shape = 's32[2]{0}', space=sflag, size = 0x8, scoped, tag = 'scoped memory for tpu_custom_call.1']
    #allocation9 [shape = 'u8[8192]{0}', space=vmem, size = 0x2000, scoped, tag = 'output window, operand 0']
    %8 = vsyncpa [#allocation5], 0
    %9 = vsyncpa [#allocation3], 0
    %s10 = scalar_lea.sflag [#allocation3], 1
    %11 = vsyncpa %s10, 0
    %12 = vsyncpa [#allocation8], 0
    %s13 = scalar_lea.sflag [#allocation8], 1
    %14 = vsyncpa %s13, 0
    %15 = vsyncpa [#allocation4], 0
    %s16 = scalar_lea.sflag [#allocation4], 1
    %17 = vsyncpa %s16, 0
    loop: start=0, step=1, limit=4
    $region2: #{tpu_custom_call.1} parent=1 // loop_pre_header
      _
    $region3: #{tpu_custom_call.1} parent=1 // loop_header
      %s19 = sphi 0, %s23
      %p20 = scmp.ge.s32.totalorder %s19, 4
      %s26 = sphi 0, %s38
      %s27 = sphi 0, %s34
      %s28 = sphi 0, %s26
      %s29 = sphi 0, %s27
      %s30 = sphi 0, %s28
      %s31 = sphi 0, %s29
      %s39 = sphi 0, %s39
      %s41 = sphi 0, %s39
      %s42 = sphi 0, %s41
      %s56 = sphi 0, %s42
      %s64 = sphi 0, %s66
      %s67 = sphi 0, %s64
      %s68 = sphi 0, %s67
      %s84 = sphi 0, %s68
      %s92 = sphi 0, %s94
      %s95 = sphi 0, %s92
      %s96 = sphi 0, %s95
      %s112 = sphi 0, %s96
      %s120 = sphi 0, %s122
      %s123 = sphi 0, %s120
      %s124 = sphi 0, %s123
      %s140 = sphi 0, %s124
    $region4: #{tpu_custom_call.1} parent=1 // loop_header_branch
      %22 = sbr.rel (%p20) target = $region8
    $region5: #{tpu_custom_call.1} parent=1 // loop_body
      %s24 = ssub.s32 %s19, 1
      %s25 = ssub.s32 %s19, 2
      %s32 = sadd.s32 1, %s27
      %p33 = scmp.ge.s32.totalorder %s32, 1
      %s34 = scalar_select %p33, 0, %s32
      %s35 = sadd.s32 1, %s26
      %s36 = scalar_select %p33, %s35, %s26
      %p37 = scmp.ge.s32.totalorder %s36, 2
      %s38 = scalar_select %p37, 0, %s36
      %s40 = sadd.s32 %s39, 1
      %p43 = scmp.eq.s32.totalorder %s19, 1
      %p44 = scmp.ne.s32.totalorder %s39, %s41
      %p45 = scmp.eq.s32.totalorder %s19, 0
      %p46 = por %p44, %p45
      %p47 = scmp.ne.s32.totalorder %s39, %s41
      %p48 = scmp.eq.s32.totalorder %s24, 1
      %p49 = por %p47, %p48
      %p50 = scmp.ne.s32.totalorder %s41, %s42
      %p51 = scmp.eq.s32.totalorder %s24, 0
      %p52 = por %p50, %p51
      %p53 = scmp.ne.s32.totalorder %s41, %s42
      %p54 = scmp.eq.s32.totalorder %s25, 1
      %p55 = por %p53, %p54
      %p57 = scmp.ne.s32.totalorder %s42, %s56
      %p58 = scmp.eq.s32.totalorder %s25, 0
      %p59 = por %p57, %p58
      %s60 = ssub.s32 %s26, %s38
      %s61 = ssub.s32 %s27, %s34
      %s62 = sor.u32 %s60, %s61
      %p63 = scmp.eq.s32.totalorder %s62, 0
      %s65 = sadd.s32 %s64, 1
      %s66 = scalar_select %p63, %s64, %s65
      %p69 = pneg %p63
      %p70 = scmp.eq.s32.totalorder %s19, 1
      %p71 = por %p69, %p70
      %p72 = scmp.ne.s32.totalorder %s64, %s67
      %p73 = scmp.eq.s32.totalorder %s19, 0
      %p74 = por %p72, %p73
      %p75 = scmp.ne.s32.totalorder %s64, %s67
      %p76 = scmp.eq.s32.totalorder %s24, 1
      %p77 = por %p75, %p76
      %p78 = scmp.ne.s32.totalorder %s67, %s68
      %p79 = scmp.eq.s32.totalorder %s24, 0
      %p80 = por %p78, %p79
      %p81 = scmp.ne.s32.totalorder %s67, %s68
      %p82 = scmp.eq.s32.totalorder %s25, 1
      %p83 = por %p81, %p82
      %p85 = scmp.ne.s32.totalorder %s68, %s84
      %p86 = scmp.eq.s32.totalorder %s25, 0
      %p87 = por %p85, %p86
      %s88 = ssub.s32 %s26, %s38
      %s89 = ssub.s32 %s27, %s34
      %s90 = sor.u32 %s88, %s89
      %p91 = scmp.eq.s32.totalorder %s90, 0
      %s93 = sadd.s32 %s92, 1
      %s94 = scalar_select %p91, %s92, %s93
      %p97 = pneg %p91
      %p98 = scmp.eq.s32.totalorder %s19, 1
      %p99 = por %p97, %p98
      %p100 = scmp.ne.s32.totalorder %s92, %s95
      %p101 = scmp.eq.s32.totalorder %s19, 0
      %p102 = por %p100, %p101
      %p103 = scmp.ne.s32.totalorder %s92, %s95
      %p104 = scmp.eq.s32.totalorder %s24, 1
      %p105 = por %p103, %p104
      %p106 = scmp.ne.s32.totalorder %s95, %s96
      %p107 = scmp.eq.s32.totalorder %s24, 0
      %p108 = por %p106, %p107
      %p109 = scmp.ne.s32.totalorder %s95, %s96
      %p110 = scmp.eq.s32.totalorder %s25, 1
      %p111 = por %p109, %p110
      %p113 = scmp.ne.s32.totalorder %s96, %s112
      %p114 = scmp.eq.s32.totalorder %s25, 0
      %p115 = por %p113, %p114
      %s116 = ssub.s32 %s26, %s38
      %s117 = ssub.s32 %s27, %s34
      %s118 = sor.u32 %s116, %s117
      %p119 = scmp.eq.s32.totalorder %s118, 0
      %s121 = sadd.s32 %s120, 1
      %s122 = scalar_select %p119, %s120, %s121
      %p125 = pneg %p119
      %p126 = scmp.eq.s32.totalorder %s19, 1
      %p127 = por %p125, %p126
      %p128 = scmp.ne.s32.totalorder %s120, %s123
      %p129 = scmp.eq.s32.totalorder %s19, 0
      %p130 = por %p128, %p129
      %p131 = scmp.ne.s32.totalorder %s120, %s123
      %p132 = scmp.eq.s32.totalorder %s24, 1
      %p133 = por %p131, %p132
      %p134 = scmp.ne.s32.totalorder %s123, %s124
      %p135 = scmp.eq.s32.totalorder %s24, 0
      %p136 = por %p134, %p135
      %p137 = scmp.ne.s32.totalorder %s123, %s124
      %p138 = scmp.eq.s32.totalorder %s25, 1
      %p139 = por %p137, %p138
      %p141 = scmp.ne.s32.totalorder %s124, %s140
      %p142 = scmp.eq.s32.totalorder %s25, 0
      %p143 = por %p141, %p142
      %p144 = scmp.le.s32.totalorder 1, %s19
      %p145 = scmp.lt.s32.totalorder %s19, 3
      %p146 = pnand %p144, %p145
      %p147 = pneg %p146
      // Predicated region
      $region9: #{tpu_custom_call.1} parent=5 // pred_check
        _
      $region10: #{tpu_custom_call.1} parent=5 // pred_check_branch
        %149 = sbr.rel (%p146) target = $region12
      $region11: #{tpu_custom_call.1} parent=5 // pred_region
        %s150 = ssub.s32 %s19, 1
        // Predicated region
        $region13: #{tpu_custom_call.1} parent=11 // pred_check
          %p151 = pneg %p52
        $region14: #{tpu_custom_call.1} parent=11 // pred_check_branch
          %153 = sbr.rel (%p151) target = $region16
        $region15: #{tpu_custom_call.1} parent=11 // pred_region
          %s155 = ssub.s32 16, 16
          %156 = vsyncadd [#allocation5], %s155
          %159 = dma.hbm_to_smem %s0, 16, [#allocation2], [#allocation5]
        $region16: #{tpu_custom_call.1} parent=11 // pred_fallthru
          _
      $region12: #{tpu_custom_call.1} parent=5 // pred_fallthru
        _
      %p160 = scmp.lt.s32.totalorder %s19, 2
      // Predicated region
      $region17: #{tpu_custom_call.1} parent=5 // pred_check
        %p161 = pneg %p160
      $region18: #{tpu_custom_call.1} parent=5 // pred_check_branch
        %163 = sbr.rel (%p161) target = $region20
      $region19: #{tpu_custom_call.1} parent=5 // pred_region
        // Predicated region
        $region21: #{tpu_custom_call.1} parent=19 // pred_check
          %p164 = pneg %p74
        $region22: #{tpu_custom_call.1} parent=19 // pred_check_branch
          %166 = sbr.rel (%p164) target = $region24
        $region23: #{tpu_custom_call.1} parent=19 // pred_region
          %s167 = sand.u32 %s64, 1
          %s168 = scalar_lea.sflag [#allocation3], %s167
          %s169 = sand.u32 %s64, 1
          %s170 = smul.addr %s169, 8
          %s171 = scalar_lea.vmem [#allocation6], %s170
          %s173 = ssub.s32 128, 128
          %174 = vsyncadd %s168, %s173
          %s175 = sadd.s32 %s27, %s26
          %s176 = smul.addr %s175, 128
          %s177 = scalar_lea.hbm %s1, %s176
          %s179 = sshll.u32 %s171, 4
          %s180 = int_to_ptr.vmem [resolvable:$true] %s179
          %182 = dma.hbm_to_vmem [thread:$0]  %s177, 128, %s180, %s168
        $region24: #{tpu_custom_call.1} parent=19 // pred_fallthru
          _
        // Predicated region
        $region25: #{tpu_custom_call.1} parent=19 // pred_check
          %p183 = pneg %p102
        $region26: #{tpu_custom_call.1} parent=19 // pred_check_branch
          %185 = sbr.rel (%p183) target = $region28
        $region27: #{tpu_custom_call.1} parent=19 // pred_region
          %s186 = sand.u32 %s92, 1
          %s187 = scalar_lea.sflag [#allocation8], %s186
          %s188 = sand.u32 %s92, 1
          %s189 = smul.addr %s188, 8
          %s190 = scalar_lea.vmem [#allocation7], %s189
          %s192 = ssub.s32 128, 128
          %193 = vsyncadd %s187, %s192
          %s194 = sadd.s32 %s27, %s26
          %s195 = smul.addr %s194, 128
          %s196 = scalar_lea.hbm %s2, %s195
          %s198 = sshll.u32 %s190, 4
          %s199 = int_to_ptr.vmem [resolvable:$true] %s198
          %201 = dma.hbm_to_vmem [thread:$0]  %s196, 128, %s199, %s187
        $region28: #{tpu_custom_call.1} parent=19 // pred_fallthru
          _
      $region20: #{tpu_custom_call.1} parent=5 // pred_fallthru
        _
      %p202 = scmp.le.s32.totalorder 1, %s19
      %p203 = scmp.lt.s32.totalorder %s19, 3
      %p204 = pnand %p202, %p203
      %p205 = pneg %p204
      // Predicated region
      $region29: #{tpu_custom_call.1} parent=5 // pred_check
        _
      $region30: #{tpu_custom_call.1} parent=5 // pred_check_branch
        %207 = sbr.rel (%p204) target = $region32
      $region31: #{tpu_custom_call.1} parent=5 // pred_region
        %s208 = ssub.s32 %s19, 1
        // Predicated region
        $region33: #{tpu_custom_call.1} parent=31 // pred_check
          %p209 = pneg %p52
        $region34: #{tpu_custom_call.1} parent=31 // pred_check_branch
          %211 = sbr.rel (%p209) target = $region36
        $region35: #{tpu_custom_call.1} parent=31 // pred_region
          %212 = dma.done [#allocation5], 16
        $region36: #{tpu_custom_call.1} parent=31 // pred_fallthru
          _
        %s213 = sand.u32 %s67, 1
        %s214 = scalar_lea.sflag [#allocation3], %s213
        %s215 = sand.u32 %s67, 1
        %s216 = smul.addr %s215, 8
        %s217 = scalar_lea.vmem [#allocation6], %s216
        // Predicated region
        $region37: #{tpu_custom_call.1} parent=31 // pred_check
          %p218 = pneg %p80
        $region38: #{tpu_custom_call.1} parent=31 // pred_check_branch
          %220 = sbr.rel (%p218) target = $region40
        $region39: #{tpu_custom_call.1} parent=31 // pred_region
          %221 = dma.done %s214, 128
        $region40: #{tpu_custom_call.1} parent=31 // pred_fallthru
          _
        %s222 = sand.u32 %s95, 1
        %s223 = scalar_lea.sflag [#allocation8], %s222
        %s224 = sand.u32 %s95, 1
        %s225 = smul.addr %s224, 8
        %s226 = scalar_lea.vmem [#allocation7], %s225
        // Predicated region
        $region41: #{tpu_custom_call.1} parent=31 // pred_check
          %p227 = pneg %p108
        $region42: #{tpu_custom_call.1} parent=31 // pred_check_branch
          %229 = sbr.rel (%p227) target = $region44
        $region43: #{tpu_custom_call.1} parent=31 // pred_region
          %230 = dma.done %s223, 128
        $region44: #{tpu_custom_call.1} parent=31 // pred_fallthru
          _
        %231 = sfence
        %p232 = pneg %p52
        %p233 = pneg %p49
        %s234 = sand.u32 %s67, 1
        %s235 = scalar_lea.sflag [#allocation3], %s234
        %s236 = sand.u32 %s67, 1
        %s237 = smul.addr %s236, 8
        %s238 = scalar_lea.vmem [#allocation6], %s237
        %p239 = pneg %p80
        %p240 = pneg %p77
        %s241 = sand.u32 %s95, 1
        %s242 = scalar_lea.sflag [#allocation8], %s241
        %s243 = sand.u32 %s95, 1
        %s244 = smul.addr %s243, 8
        %s245 = scalar_lea.vmem [#allocation7], %s244
        %p246 = pneg %p108
        %p247 = pneg %p105
        %p248 = pneg %p136
        %p249 = pneg %p133
        %s250 = sand.u32 %s123, 1
        %s251 = scalar_lea.sflag [#allocation4], %s250
        %s252 = sand.u32 %s123, 1
        %s253 = smul.addr %s252, 8
        %s254 = scalar_lea.vmem [#allocation9], %s253
        %s255 = sld [smem:[#allocation2 + %s28]]
        %v256 = vld [vmem:[%s226] sm:$0xff]
        %v257 = vld [vmem:[%s217] sm:$0xff]
        %v258 = vsub.f32 %v256, %v257
        %v259 = vand.u32 2147483647, %v258
        %s260 = smul.f32 %s255, %s255
        %s261 = smul.f32 %s255, 2.0
        %v262 = vstv %s261
        %v263 = vrcp.pop %v262
        %s264 = vtos %v263
        %v265 = vstv %s255
        %vm266 = vcmp.le.f32.partialorder %v259, %v265
        %v267 = vmul.f32 %v259, %v259
        %v268 = vstv %s260
        %v269 = vadd.f32 %v267, %v268
        %v270 = vstv %s264
        %v271 = vmul.f32 %v269, %v270
        %v272 = vsel %vm266, %v259, %v271
        %273 = vst [vmem:[%s254] sm:$0xff] %v272
        %s274 = sand.u32 %s123, 1
        %s275 = scalar_lea.sflag [#allocation4], %s274
        %s276 = sand.u32 %s123, 1
        %s277 = smul.addr %s276, 8
        %s278 = scalar_lea.vmem [#allocation9], %s277
        // Predicated region
        $region45: #{tpu_custom_call.1} parent=31 // pred_check
          %p279 = pneg %p133
        $region46: #{tpu_custom_call.1} parent=31 // pred_check_branch
          %281 = sbr.rel (%p279) target = $region48
        $region47: #{tpu_custom_call.1} parent=31 // pred_region
          %s283 = ssub.s32 128, 128
          %284 = vsyncadd %s275, %s283
          %s285 = sadd.s32 %s29, %s28
          %s286 = smul.addr %s285, 128
          %s287 = scalar_lea.hbm %s3, %s286
          %s289 = sshll.u32 %s278, 4
          %s290 = int_to_ptr.vmem [resolvable:$true] %s289
          %292 = dma.vmem_to_hbm [thread:$0]  %s290, 128, %s287, %s275
        $region48: #{tpu_custom_call.1} parent=31 // pred_fallthru
          _
      $region32: #{tpu_custom_call.1} parent=5 // pred_fallthru
        _
      %p293 = scmp.le.s32.totalorder 2, %s19
      // Predicated region
      $region49: #{tpu_custom_call.1} parent=5 // pred_check
        %p294 = pneg %p293
      $region50: #{tpu_custom_call.1} parent=5 // pred_check_branch
        %296 = sbr.rel (%p294) target = $region52
      $region51: #{tpu_custom_call.1} parent=5 // pred_region
        %s297 = ssub.s32 %s19, 2
        // Predicated region
        $region53: #{tpu_custom_call.1} parent=51 // pred_check
          %p298 = pneg %p139
        $region54: #{tpu_custom_call.1} parent=51 // pred_check_branch
          %300 = sbr.rel (%p298) target = $region56
        $region55: #{tpu_custom_call.1} parent=51 // pred_region
          %s301 = sand.u32 %s124, 1
          %s302 = scalar_lea.sflag [#allocation4], %s301
          %s303 = sand.u32 %s124, 1
          %s304 = smul.addr %s303, 8
          %s305 = scalar_lea.vmem [#allocation9], %s304
          %306 = dma.done %s302, 128
        $region56: #{tpu_custom_call.1} parent=51 // pred_fallthru
          _
      $region52: #{tpu_custom_call.1} parent=5 // pred_fallthru
        _
    $region6: #{tpu_custom_call.1} parent=1 // loop_footer
      %s23 = sadd.s32 1, %s19
    $region7: #{tpu_custom_call.1} parent=1 // loop_footer_branch
      %18 = sbr.rel target = $region3
    $region8: #{tpu_custom_call.1} parent=1 // loop_exit
      _
    %307 = vsyncpa [#allocation3], 1
    %s308 = scalar_lea.sflag [#allocation3], 1
    %309 = vsyncpa %s308, 1
    %310 = vsyncpa [#allocation8], 1
    %s311 = scalar_lea.sflag [#allocation8], 1
    %312 = vsyncpa %s311, 1
    %313 = vsyncpa [#allocation4], 1
    %s314 = scalar_lea.sflag [#allocation4], 1
    %315 = vsyncpa %s314, 1
    %316 = vsyncpa [#allocation5], 1
    %s317 = scalar_lea.sflag [#allocation5], 1
    %318 = vsyncpa %s317, 1

</llo_original>
